<compile_context>
chip_gen: v7x
topology: tpu7x:2x2x1
jax: 0.10.0
libtpu: 0.0.40
codegen_flags: <defaults>
</compile_context>

<pallas_src>
import jax
import jax.numpy as jnp
from jax.experimental import pallas as pl
from jax.experimental.pallas import tpu as pltpu

HIDDEN = 32     # hidden_size
OUTPUT = 64     # output_size (vocab size)
OUT_PAD = 128   # vocab dim padded to one full lane width for an unmasked output store


def _decoder_kernel(
    tok_ref,                 # SMEM (1,) int32 token id
    emb_ref,                 # (OUTPUT, H)   embedding table
    h_ref,                   # (1, H)        previous GRU hidden state
    wi_ref, bi_ref,          # (H, 3H), (1, 3H)   fused GRU input weights/bias  [r|z|n]
    wh_ref, bh_ref,          # (H, 3H), (1, 3H)   fused GRU hidden weights/bias [r|z|n]
    wo_ref, bo_ref,          # (H, OUT_PAD), (1, OUT_PAD)  out Linear (zero-padded cols)
    out_ref, hnew_ref,       # (1, OUT_PAD), (1, H)
):
    f32 = jnp.float32
    H = HIDDEN
    tok = tok_ref[0]

    # in-kernel embedding gather: one-hot row @ table on the MXU (exact, no XLA gather)
    onehot = (jax.lax.broadcasted_iota(jnp.int32, (1, OUTPUT), 1) == tok).astype(f32)
    emb = jnp.dot(onehot, emb_ref[...], preferred_element_type=f32)      # (1, H)

    # ReLU activation on the embedded token (module applies act before the GRU)
    x = jnp.maximum(emb, 0.0)
    h = h_ref[...]                                                       # (1, H)

    # fused GRU matmuls: one wide dot for the input path, one for the hidden path
    gi = jnp.dot(x, wi_ref[...], preferred_element_type=f32) + bi_ref[...]   # (1, 3H)
    gh = jnp.dot(h, wh_ref[...], preferred_element_type=f32) + bh_ref[...]   # (1, 3H)

    # PyTorch gate ordering (r, z, n); static lane slices of the fused results
    r = jax.nn.sigmoid(gi[:, 0:H] + gh[:, 0:H])
    z = jax.nn.sigmoid(gi[:, H:2 * H] + gh[:, H:2 * H])
    n = jnp.tanh(gi[:, 2 * H:3 * H] + r * gh[:, 2 * H:3 * H])
    h_new = (1.0 - z) * n + z * h                                        # (1, H)

    # out: Linear(H -> OUTPUT), lane-dense padded to OUT_PAD
    out_ref[...] = jnp.dot(h_new, wo_ref[...], preferred_element_type=f32) + bo_ref[...]
    hnew_ref[...] = h_new


def decoder_forward(x, hidden, p, encoder_output=None):
    """x: (1,1) int32 token id; hidden: (1,1,H). encoder_output is unused (as in the module)."""
    del encoder_output
    tok = x.reshape(-1).astype(jnp.int32)[:1]          # (1,) scalar for SMEM
    h0 = hidden.reshape(1, HIDDEN)

    smem = pl.BlockSpec(memory_space=pltpu.MemorySpace.SMEM)
    vmem = pl.BlockSpec(memory_space=pltpu.MemorySpace.VMEM)

    out_pad, h_new = pl.pallas_call(
        _decoder_kernel,
        out_shape=(jax.ShapeDtypeStruct((1, OUT_PAD), jnp.float32),
                   jax.ShapeDtypeStruct((1, HIDDEN), jnp.float32)),
        in_specs=[smem] + [vmem] * 8,
        out_specs=(vmem, vmem),
    )(tok, p["embedding"], h0,
      p["w_i"], p["b_i"], p["w_h"], p["b_h"],
      p["w_out"], p["b_out"])

    return out_pad[:, :OUTPUT], h_new.reshape(1, 1, HIDDEN)


def reference_forward(x, hidden, p, encoder_output=None):
    """Pure-JAX reference mirroring the PyTorch DecoderRNN forward."""
    del encoder_output
    H = HIDDEN
    tok = x.reshape(-1)[0]
    emb = p["embedding"][tok].reshape(1, H)
    xa = jnp.maximum(emb, 0.0)
    h = hidden.reshape(1, H)
    gi = xa @ p["w_i"] + p["b_i"]
    gh = h @ p["w_h"] + p["b_h"]
    r = jax.nn.sigmoid(gi[:, 0:H] + gh[:, 0:H])
    z = jax.nn.sigmoid(gi[:, H:2 * H] + gh[:, H:2 * H])
    n = jnp.tanh(gi[:, 2 * H:3 * H] + r * gh[:, 2 * H:3 * H])
    h_new = (1.0 - z) * n + z * h
    out = h_new @ p["w_out"][:, :OUTPUT] + p["b_out"][:, :OUTPUT]
    return out, h_new.reshape(1, 1, H)


def init_params(key):
    ks = jax.random.split(key, 8)

    def unif(k, fan_in, shape):
        b = fan_in ** -0.5
        return jax.random.uniform(k, shape, jnp.float32, -b, b)

    p = {}
    p["embedding"] = jax.random.normal(ks[0], (OUTPUT, HIDDEN), jnp.float32)
    # GRU(H, H): weight_ih / weight_hh stored transposed and fused per path, gate order [r|z|n]
    p["w_i"] = unif(ks[1], HIDDEN, (HIDDEN, 3 * HIDDEN))
    p["w_h"] = unif(ks[2], HIDDEN, (HIDDEN, 3 * HIDDEN))
    p["b_i"] = unif(ks[3], HIDDEN, (1, 3 * HIDDEN))
    p["b_h"] = unif(ks[4], HIDDEN, (1, 3 * HIDDEN))
    # out: Linear(H -> OUTPUT), stored lane-dense with zero padding up to OUT_PAD columns
    w_out = unif(ks[5], HIDDEN, (HIDDEN, OUTPUT))
    b_out = unif(ks[6], HIDDEN, (1, OUTPUT))
    p["w_out"] = jnp.pad(w_out, ((0, 0), (0, OUT_PAD - OUTPUT)))
    p["b_out"] = jnp.pad(b_out, ((0, 0), (0, OUT_PAD - OUTPUT)))
    return p


if __name__ == "__main__":
    key = jax.random.PRNGKey(0)
    pk, hk = jax.random.split(key, 2)
    params = init_params(pk)

    x = jnp.array([[3]], dtype=jnp.int32)                         # token index (like LongTensor [[3]])
    hidden = jax.random.normal(hk, (1, 1, HIDDEN), jnp.float32)   # previous GRU hidden

    out, h_new = jax.jit(decoder_forward)(x, hidden, params)
    out = jax.block_until_ready(out)
    h_new = jax.block_until_ready(h_new)

    ref_out, ref_h = reference_forward(x, hidden, params)
    assert out.shape == (1, OUTPUT) and h_new.shape == (1, 1, HIDDEN)
    assert jnp.allclose(out, ref_out, atol=1e-5, rtol=1e-5)
    assert jnp.allclose(h_new, ref_h, atol=1e-5, rtol=1e-5)
    print("KERNEL_OK")
</pallas_src>

<mosaic_0001>
module attributes {stable_mosaic.version = 11 : i64} {
  func.func @_decoder_kernel(%arg0: memref<1xi32, #tpu.memory_space<smem>>, %arg1: memref<64x32xf32, #tpu.memory_space<vmem>>, %arg2: memref<1x32xf32, #tpu.memory_space<vmem>>, %arg3: memref<32x96xf32, #tpu.memory_space<vmem>>, %arg4: memref<1x96xf32, #tpu.memory_space<vmem>>, %arg5: memref<32x96xf32, #tpu.memory_space<vmem>>, %arg6: memref<1x96xf32, #tpu.memory_space<vmem>>, %arg7: memref<32x128xf32, #tpu.memory_space<vmem>>, %arg8: memref<1x128xf32, #tpu.memory_space<vmem>>, %arg9: memref<1x128xf32, #tpu.memory_space<vmem>>, %arg10: memref<1x32xf32, #tpu.memory_space<vmem>>) attributes {dimension_semantics = [], scalar_prefetch = 0 : i64, scratch_operands = 0 : i64, tpu.core_type = #tpu.core_type<tc>} {
    %c0 = arith.constant 0 : index
    %0 = memref.load %arg0[%c0] : memref<1xi32, #tpu.memory_space<smem>>
    %1 = tpu.iota {dimensions = array<i32: 1>} : vector<1x64xi32>
    %2 = vector.broadcast %0 : i32 to vector<1x64xi32>
    %3 = arith.cmpi eq, %1, %2 : vector<1x64xi32>
    %4 = arith.extui %3 : vector<1x64xi1> to vector<1x64xi32>
    %5 = arith.sitofp %4 : vector<1x64xi32> to vector<1x64xf32>
    %c0_0 = arith.constant 0 : index
    %c0_1 = arith.constant 0 : index
    %6 = vector.load %arg1[%c0_0, %c0_1] : memref<64x32xf32, #tpu.memory_space<vmem>>, vector<64x32xf32>
    %cst = arith.constant dense<0.000000e+00> : vector<1x32xf32>
    %7 = tpu.matmul %5, %6, %cst {dimension_numbers = #tpu.dot_dimension_numbers<[1], [0], [0], [1], [0, 0, 1, 1], [], []>} : vector<1x64xf32>, vector<64x32xf32>, vector<1x32xf32> -> vector<1x32xf32>
    %cst_2 = arith.constant 0.000000e+00 : f32
    %8 = vector.broadcast %cst_2 : f32 to vector<1x32xf32>
    %9 = arith.maximumf %7, %8 : vector<1x32xf32>
    %c0_3 = arith.constant 0 : index
    %c0_4 = arith.constant 0 : index
    %10 = vector.load %arg2[%c0_3, %c0_4] : memref<1x32xf32, #tpu.memory_space<vmem>>, vector<1x32xf32>
    %c0_5 = arith.constant 0 : index
    %c0_6 = arith.constant 0 : index
    %11 = vector.load %arg3[%c0_5, %c0_6] : memref<32x96xf32, #tpu.memory_space<vmem>>, vector<32x96xf32>
    %cst_7 = arith.constant dense<0.000000e+00> : vector<1x96xf32>
    %12 = tpu.matmul %9, %11, %cst_7 {dimension_numbers = #tpu.dot_dimension_numbers<[1], [0], [0], [1], [0, 0, 1, 1], [], []>} : vector<1x32xf32>, vector<32x96xf32>, vector<1x96xf32> -> vector<1x96xf32>
    %c0_8 = arith.constant 0 : index
    %c0_9 = arith.constant 0 : index
    %13 = vector.load %arg4[%c0_8, %c0_9] : memref<1x96xf32, #tpu.memory_space<vmem>>, vector<1x96xf32>
    %14 = arith.addf %12, %13 : vector<1x96xf32>
    %c0_10 = arith.constant 0 : index
    %c0_11 = arith.constant 0 : index
    %15 = vector.load %arg5[%c0_10, %c0_11] : memref<32x96xf32, #tpu.memory_space<vmem>>, vector<32x96xf32>
    %cst_12 = arith.constant dense<0.000000e+00> : vector<1x96xf32>
    %16 = tpu.matmul %10, %15, %cst_12 {dimension_numbers = #tpu.dot_dimension_numbers<[1], [0], [0], [1], [0, 0, 1, 1], [], []>} : vector<1x32xf32>, vector<32x96xf32>, vector<1x96xf32> -> vector<1x96xf32>
    %c0_13 = arith.constant 0 : index
    %c0_14 = arith.constant 0 : index
    %17 = vector.load %arg6[%c0_13, %c0_14] : memref<1x96xf32, #tpu.memory_space<vmem>>, vector<1x96xf32>
    %18 = arith.addf %16, %17 : vector<1x96xf32>
    %19 = vector.extract_strided_slice %14 {offsets = [0, 0], sizes = [1, 32], strides = [1, 1]} : vector<1x96xf32> to vector<1x32xf32>
    %20 = vector.extract_strided_slice %18 {offsets = [0, 0], sizes = [1, 32], strides = [1, 1]} : vector<1x96xf32> to vector<1x32xf32>
    %21 = arith.addf %19, %20 : vector<1x32xf32>
    %22 = arith.negf %21 : vector<1x32xf32>
    %23 = math.exp %22 : vector<1x32xf32>
    %cst_15 = arith.constant 1.000000e+00 : f32
    %24 = vector.broadcast %cst_15 : f32 to vector<1x32xf32>
    %25 = arith.addf %24, %23 : vector<1x32xf32>
    %26 = arith.divf %24, %25 : vector<1x32xf32>
    %27 = vector.extract_strided_slice %14 {offsets = [0, 32], sizes = [1, 32], strides = [1, 1]} : vector<1x96xf32> to vector<1x32xf32>
    %28 = vector.extract_strided_slice %18 {offsets = [0, 32], sizes = [1, 32], strides = [1, 1]} : vector<1x96xf32> to vector<1x32xf32>
    %29 = arith.addf %27, %28 : vector<1x32xf32>
    %30 = arith.negf %29 : vector<1x32xf32>
    %31 = math.exp %30 : vector<1x32xf32>
    %cst_16 = arith.constant 1.000000e+00 : f32
    %32 = vector.broadcast %cst_16 : f32 to vector<1x32xf32>
    %33 = arith.addf %32, %31 : vector<1x32xf32>
    %34 = arith.divf %32, %33 : vector<1x32xf32>
    %35 = vector.extract_strided_slice %14 {offsets = [0, 64], sizes = [1, 32], strides = [1, 1]} : vector<1x96xf32> to vector<1x32xf32>
    %36 = vector.extract_strided_slice %18 {offsets = [0, 64], sizes = [1, 32], strides = [1, 1]} : vector<1x96xf32> to vector<1x32xf32>
    %37 = arith.mulf %26, %36 : vector<1x32xf32>
    %38 = arith.addf %35, %37 : vector<1x32xf32>
    %39 = math.tanh %38 : vector<1x32xf32>
    %cst_17 = arith.constant 1.000000e+00 : f32
    %40 = vector.broadcast %cst_17 : f32 to vector<1x32xf32>
    %41 = arith.subf %40, %34 : vector<1x32xf32>
    %42 = arith.mulf %41, %39 : vector<1x32xf32>
    %43 = arith.mulf %34, %10 : vector<1x32xf32>
    %44 = arith.addf %42, %43 : vector<1x32xf32>
    %c0_18 = arith.constant 0 : index
    %c0_19 = arith.constant 0 : index
    %45 = vector.load %arg7[%c0_18, %c0_19] : memref<32x128xf32, #tpu.memory_space<vmem>>, vector<32x128xf32>
    %cst_20 = arith.constant dense<0.000000e+00> : vector<1x128xf32>
    %46 = tpu.matmul %44, %45, %cst_20 {dimension_numbers = #tpu.dot_dimension_numbers<[1], [0], [0], [1], [0, 0, 1, 1], [], []>} : vector<1x32xf32>, vector<32x128xf32>, vector<1x128xf32> -> vector<1x128xf32>
    %c0_21 = arith.constant 0 : index
    %c0_22 = arith.constant 0 : index
    %47 = vector.load %arg8[%c0_21, %c0_22] : memref<1x128xf32, #tpu.memory_space<vmem>>, vector<1x128xf32>
    %48 = arith.addf %46, %47 : vector<1x128xf32>
    %c0_23 = arith.constant 0 : index
    %c0_24 = arith.constant 0 : index
    %49 = vector.load %arg9[%c0_23, %c0_24] : memref<1x128xf32, #tpu.memory_space<vmem>>, vector<1x128xf32>
    tpu.vector_store %arg9[%c0_23, %c0_24], %48 {strides = array<i32>} : memref<1x128xf32, #tpu.memory_space<vmem>>, vector<1x128xf32>,
    %c0_25 = arith.constant 0 : index
    %c0_26 = arith.constant 0 : index
    %50 = vector.load %arg10[%c0_25, %c0_26] : memref<1x32xf32, #tpu.memory_space<vmem>>, vector<1x32xf32>
    tpu.vector_store %arg10[%c0_25, %c0_26], %44 {strides = array<i32>} : memref<1x32xf32, #tpu.memory_space<vmem>>, vector<1x32xf32>,
    return
  }
}

</mosaic_0001>

<llo_original>
// kernel: decoder_forward.1
$region0: #{decoder_forward.1}
  #allocation0 [shape = 'u32[]', space=smem, size = 0x4, offset = 0x4, fixed_abs, tag = 'smem constant byte address 0x4 - core index']
  #allocation1 [shape = 'u32[144,128]{1,0:T(1,128)}', space=vmem, size = 0x12000, scoped, tag = 'internal scratch']
  #allocation2 [shape = 's32[1]{0:T(128)S(6)}', space=smem, size = 0x200, scoped, tag = 'scoped memory for decoder_forward.1']
  %s0 = inlined_call_operand.<no memory space> [shape: s32[1], index: 0, kind: input, shape index: {}]
  %s1 = inlined_call_operand.vmem [shape: f32[64,32], index: 1, kind: input, shape index: {}]
  %s2 = inlined_call_operand.vmem [shape: f32[1,32], index: 2, kind: input, shape index: {}]
  %s3 = inlined_call_operand.vmem [shape: f32[32,96], index: 3, kind: input, shape index: {}]
  %s4 = inlined_call_operand.vmem [shape: f32[1,96], index: 4, kind: input, shape index: {}]
  %s5 = inlined_call_operand.vmem [shape: f32[32,96], index: 5, kind: input, shape index: {}]
  %s6 = inlined_call_operand.vmem [shape: f32[1,96], index: 6, kind: input, shape index: {}]
  %s7 = inlined_call_operand.vmem [shape: f32[32,128], index: 7, kind: input, shape index: {}]
  %s8 = inlined_call_operand.vmem [shape: f32[1,128], index: 8, kind: input, shape index: {}]
  %s9 = inlined_call_operand.hbm [shape: f32[1,128], index: 9, kind: output, shape index: {0}]
  %s10 = inlined_call_operand.hbm [shape: f32[1,32], index: 10, kind: output, shape index: {1}]
  %11 = xla_tuple %s9, %s10
  %s12 = sld [smem:[#allocation0]]
  $region54: #{decoder_forward.1} parent=0
    _
  %s14 = ssub.s32 1, %s12
  %s15 = scalar_select 0, %s14, %s12
  %16 = sst [smem:[#allocation2]] %s0
  $region1: #{decoder_forward.1} parent=0
    #allocation3 [shape = 'u8[512]{0}', space=vmem, size = 0x400, scoped, tag = 'output window, operand 0, single buffered']
    #allocation4 [shape = 's32[1]{0}', space=sflag, size = 0x4, scoped, tag = 'scoped memory for decoder_forward.1']
    #allocation5 [shape = 'u8[512]{0}', space=vmem, size = 0x400, scoped, tag = 'output window, operand 1, single buffered']
    #allocation6 [shape = 's32[1]{0}', space=sflag, size = 0x4, scoped, tag = 'scoped memory for decoder_forward.1']
    %17 = vsyncpa [#allocation4], 0
    %18 = vsyncpa [#allocation6], 0
    // Predicated region
    $region2: #{decoder_forward.1} parent=1 // pred_check
      _
    $region3: #{decoder_forward.1} parent=1 // pred_check_branch
      %20 = sbr.rel (0) target = $region5
    $region4: #{decoder_forward.1} parent=1 // pred_region
      _
    $region5: #{decoder_forward.1} parent=1 // pred_fallthru
      _
    // Predicated region
    $region6: #{decoder_forward.1} parent=1 // pred_check
      _
    $region7: #{decoder_forward.1} parent=1 // pred_check_branch
      %22 = sbr.rel (0) target = $region9
    $region8: #{decoder_forward.1} parent=1 // pred_region
      _
    $region9: #{decoder_forward.1} parent=1 // pred_fallthru
      _
    // Predicated region
    $region10: #{decoder_forward.1} parent=1 // pred_check
      _
    $region11: #{decoder_forward.1} parent=1 // pred_check_branch
      %24 = sbr.rel (0) target = $region13
    $region12: #{decoder_forward.1} parent=1 // pred_region
      _
    $region13: #{decoder_forward.1} parent=1 // pred_fallthru
      _
    // Predicated region
    $region14: #{decoder_forward.1} parent=1 // pred_check
      _
    $region15: #{decoder_forward.1} parent=1 // pred_check_branch
      %26 = sbr.rel (0) target = $region17
    $region16: #{decoder_forward.1} parent=1 // pred_region
      _
    $region17: #{decoder_forward.1} parent=1 // pred_fallthru
      _
    // Predicated region
    $region18: #{decoder_forward.1} parent=1 // pred_check
      _
    $region19: #{decoder_forward.1} parent=1 // pred_check_branch
      %28 = sbr.rel (0) target = $region21
    $region20: #{decoder_forward.1} parent=1 // pred_region
      _
    $region21: #{decoder_forward.1} parent=1 // pred_fallthru
      _
    // Predicated region
    $region22: #{decoder_forward.1} parent=1 // pred_check
      _
    $region23: #{decoder_forward.1} parent=1 // pred_check_branch
      %30 = sbr.rel (0) target = $region25
    $region24: #{decoder_forward.1} parent=1 // pred_region
      _
    $region25: #{decoder_forward.1} parent=1 // pred_fallthru
      _
    // Predicated region
    $region26: #{decoder_forward.1} parent=1 // pred_check
      _
    $region27: #{decoder_forward.1} parent=1 // pred_check_branch
      %32 = sbr.rel (0) target = $region29
    $region28: #{decoder_forward.1} parent=1 // pred_region
      _
    $region29: #{decoder_forward.1} parent=1 // pred_fallthru
      _
    // Predicated region
    $region30: #{decoder_forward.1} parent=1 // pred_check
      _
    $region31: #{decoder_forward.1} parent=1 // pred_check_branch
      %34 = sbr.rel (0) target = $region33
    $region32: #{decoder_forward.1} parent=1 // pred_region
      _
    $region33: #{decoder_forward.1} parent=1 // pred_fallthru
      _
    // Predicated region
    $region34: #{decoder_forward.1} parent=1 // pred_check
      _
    $region35: #{decoder_forward.1} parent=1 // pred_check_branch
      %36 = sbr.rel (0) target = $region37
    $region36: #{decoder_forward.1} parent=1 // pred_region
      _
    $region37: #{decoder_forward.1} parent=1 // pred_fallthru
      _
    %s37 = sld [smem:[#allocation2]]
    %v38 = vlaneseq
    %v39 = vand.u32 %v38, 127
    %v40 = vstv %s37
    %vm41 = vcmp.eq.s32.totalorder %v39, %v40
    %v42 = vsel %vm41, 1, 0
    %v43 = vcvt.s32.f32 %v42
    %v44 = vld [vmem:[%s1] sm:$0xff]
    %v45 = vld [vmem:[%s1 + $0x8] sm:$0xff]
    %v46 = vld [vmem:[%s1 + $0x10] sm:$0xff]
    %v47 = vld [vmem:[%s1 + $0x18] sm:$0xff]
    %v48 = vld [vmem:[%s1 + $0x20] sm:$0xff]
    %v49 = vld [vmem:[%s1 + $0x28] sm:$0xff]
    %v50 = vld [vmem:[%s1 + $0x30] sm:$0xff]
    %v51 = vld [vmem:[%s1 + $0x38] sm:$0xff]
    %vm52 = vcmask 523264
    %v54 = vsel %vm52, %v43, 0
    %56 = vmatprep.subr.mxu0 0.0
    %57 = vmatpush1.msra.mxu0 %v44
    %58 = vmatprep.subr.mxu0 0.0
    %59 = vmatpush1.msra.mxu0 %v45
    %60 = vmatprep.subr.mxu0 0.0
    %61 = vmatpush1.msra.mxu0 %v46
    %62 = vmatprep.subr.mxu0 0.0
    %63 = vmatpush1.msra.mxu0 %v47
    %64 = vmatprep.subr.mxu0 0.0
    %65 = vmatpush1.msra.mxu0 %v48
    %66 = vmatprep.subr.mxu0 0.0
    %67 = vmatpush1.msra.mxu0 %v49
    %68 = vmatprep.subr.mxu0 0.0
    %69 = vmatpush1.msra.mxu0 %v50
    %70 = vmatprep.subr.mxu0 0.0
    %71 = vmatpush1.msra.mxu0 %v51
    %72 = vmatprep.subr.mxu0 0.0
    %73 = vmatpush1.msra.mxu0 0.0
    %74 = vmatprep.subr.mxu0 0.0
    %75 = vmatpush1.msra.mxu0 0.0
    %76 = vmatprep.subr.mxu0 0.0
    %77 = vmatpush1.msra.mxu0 0.0
    %78 = vmatprep.subr.mxu0 0.0
    %79 = vmatpush1.msra.mxu0 0.0
    %80 = vmatprep.subr.mxu0 0.0
    %81 = vmatpush1.msra.mxu0 0.0
    %82 = vmatprep.subr.mxu0 0.0
    %83 = vmatpush1.msra.mxu0 0.0
    %84 = vmatprep.subr.mxu0 0.0
    %85 = vmatpush1.msra.mxu0 0.0
    %86 = vmatprep.subr.mxu0 0.0
    %87 = vmatpush1.msra.mxu0 0.0
    %88 = vmatprep.subr.mxu0 0.0
    %89 = vmatpush1.msra.mxu0 0.0
    %90 = vmatprep.subr.mxu0 0.0
    %91 = vmatpush1.msra.mxu0 0.0
    %92 = vmatprep.subr.mxu0 0.0
    %93 = vmatpush1.msra.mxu0 0.0
    %94 = vmatprep.subr.mxu0 0.0
    %95 = vmatpush1.msra.mxu0 0.0
    %96 = vmatprep.subr.mxu0 0.0
    %97 = vmatpush1.msra.mxu0 0.0
    %98 = vmatprep.subr.mxu0 0.0
    %99 = vmatpush1.msra.mxu0 0.0
    %100 = vmatprep.subr.mxu0 0.0
    %101 = vmatpush1.msra.mxu0 0.0
    %102 = vmatprep.subr.mxu0 0.0
    %103 = vmatpush1.msra.mxu0 0.0
    %104 = vmatprep.subr.mxu0 0.0
    %105 = vmatpush1.msra.mxu0 0.0
    %106 = vmatprep.subr.mxu0 0.0
    %107 = vmatpush1.msra.mxu0 0.0
    %108 = vmatprep.subr.mxu0 0.0
    %109 = vmatpush1.msra.mxu0 0.0
    %110 = vmatprep.subr.mxu0 0.0
    %111 = vmatpush1.msra.mxu0 0.0
    %112 = vmatprep.subr.mxu0 0.0
    %113 = vmatpush1.msra.mxu0 0.0
    %114 = vmatprep.subr.mxu0 0.0
    %115 = vmatpush1.msra.mxu0 0.0
    %116 = vmatprep.subr.mxu0 0.0
    %117 = vmatpush1.msra.mxu0 0.0
    %118 = vmatprep.subr.mxu0 0.0
    %119 = vmatpush1.msra.mxu0 0.0
    %120 = vmatprep.mubr.f32.mxu0 0.0
    %121 = vmatmul.mubr.f32.gmra.mrb[0].mxu0 %v54
    %v122 = vpop.f32.mrb[0].mxu0
    %v123 = vadd.f32 0.0, %v122
    %v124 = vpop.f32.mrb[0].mxu0
    %125 = vdwg.mxu0
    %v126 = vmax.f32 %v123, 0.0
    %v127 = vld [vmem:[%s2] sm:$0x1]
    %v128 = vld [vmem:[%s3] sm:$0xff]
    %v129 = vld [vmem:[%s3 + $0x8] sm:$0xff]
    %v130 = vld [vmem:[%s3 + $0x10] sm:$0xff]
    %v131 = vld [vmem:[%s3 + $0x18] sm:$0xff]
    %v132 = vld [vmem:[%s4] sm:$0x1]
    %vm133 = vcmask 261120
    %v135 = vsel %vm133, %v126, 0
    %137 = vmatprep.subr.mxu0 0.0
    %138 = vmatpush1.msra.mxu0 %v128
    %139 = vmatprep.subr.mxu0 0.0
    %140 = vmatpush1.msra.mxu0 %v129
    %141 = vmatprep.subr.mxu0 0.0
    %142 = vmatpush1.msra.mxu0 %v130
    %143 = vmatprep.subr.mxu0 0.0
    %144 = vmatpush1.msra.mxu0 %v131
    %145 = vmatprep.subr.mxu0 0.0
    %146 = vmatpush1.msra.mxu0 0.0
    %147 = vmatprep.subr.mxu0 0.0
    %148 = vmatpush1.msra.mxu0 0.0
    %149 = vmatprep.subr.mxu0 0.0
    %150 = vmatpush1.msra.mxu0 0.0
    %151 = vmatprep.subr.mxu0 0.0
    %152 = vmatpush1.msra.mxu0 0.0
    %153 = vmatprep.subr.mxu0 0.0
    %154 = vmatpush1.msra.mxu0 0.0
    %155 = vmatprep.subr.mxu0 0.0
    %156 = vmatpush1.msra.mxu0 0.0
    %157 = vmatprep.subr.mxu0 0.0
    %158 = vmatpush1.msra.mxu0 0.0
    %159 = vmatprep.subr.mxu0 0.0
    %160 = vmatpush1.msra.mxu0 0.0
    %161 = vmatprep.subr.mxu0 0.0
    %162 = vmatpush1.msra.mxu0 0.0
    %163 = vmatprep.subr.mxu0 0.0
    %164 = vmatpush1.msra.mxu0 0.0
    %165 = vmatprep.subr.mxu0 0.0
    %166 = vmatpush1.msra.mxu0 0.0
    %167 = vmatprep.subr.mxu0 0.0
    %168 = vmatpush1.msra.mxu0 0.0
    %169 = vmatprep.subr.mxu0 0.0
    %170 = vmatpush1.msra.mxu0 0.0
    %171 = vmatprep.subr.mxu0 0.0
    %172 = vmatpush1.msra.mxu0 0.0
    %173 = vmatprep.subr.mxu0 0.0
    %174 = vmatpush1.msra.mxu0 0.0
    %175 = vmatprep.subr.mxu0 0.0
    %176 = vmatpush1.msra.mxu0 0.0
    %177 = vmatprep.subr.mxu0 0.0
    %178 = vmatpush1.msra.mxu0 0.0
    %179 = vmatprep.subr.mxu0 0.0
    %180 = vmatpush1.msra.mxu0 0.0
    %181 = vmatprep.subr.mxu0 0.0
    %182 = vmatpush1.msra.mxu0 0.0
    %183 = vmatprep.subr.mxu0 0.0
    %184 = vmatpush1.msra.mxu0 0.0
    %185 = vmatprep.subr.mxu0 0.0
    %186 = vmatpush1.msra.mxu0 0.0
    %187 = vmatprep.subr.mxu0 0.0
    %188 = vmatpush1.msra.mxu0 0.0
    %189 = vmatprep.subr.mxu0 0.0
    %190 = vmatpush1.msra.mxu0 0.0
    %191 = vmatprep.subr.mxu0 0.0
    %192 = vmatpush1.msra.mxu0 0.0
    %193 = vmatprep.subr.mxu0 0.0
    %194 = vmatpush1.msra.mxu0 0.0
    %195 = vmatprep.subr.mxu0 0.0
    %196 = vmatpush1.msra.mxu0 0.0
    %197 = vmatprep.subr.mxu0 0.0
    %198 = vmatpush1.msra.mxu0 0.0
    %199 = vmatprep.subr.mxu0 0.0
    %200 = vmatpush1.msra.mxu0 0.0
    %201 = vmatprep.mubr.f32.mxu0 0.0
    %202 = vmatmul.mubr.f32.gmra.mrb[0].mxu0 %v135
    %v203 = vpop.f32.mrb[0].mxu0
    %v204 = vadd.f32 %v132, %v203
    %v205 = vpop.f32.mrb[0].mxu0
    %206 = vdwg.mxu0
    %v207 = vld [vmem:[%s5] sm:$0xff]
    %v208 = vld [vmem:[%s5 + $0x8] sm:$0xff]
    %v209 = vld [vmem:[%s5 + $0x10] sm:$0xff]
    %v210 = vld [vmem:[%s5 + $0x18] sm:$0xff]
    %v211 = vld [vmem:[%s6] sm:$0x1]
    %v213 = vsel %vm133, %v127, 0
    %215 = vmatprep.subr.mxu0 0.0
    %216 = vmatpush1.msra.mxu0 %v207
    %217 = vmatprep.subr.mxu0 0.0
    %218 = vmatpush1.msra.mxu0 %v208
    %219 = vmatprep.subr.mxu0 0.0
    %220 = vmatpush1.msra.mxu0 %v209
    %221 = vmatprep.subr.mxu0 0.0
    %222 = vmatpush1.msra.mxu0 %v210
    %223 = vmatprep.subr.mxu0 0.0
    %224 = vmatpush1.msra.mxu0 0.0
    %225 = vmatprep.subr.mxu0 0.0
    %226 = vmatpush1.msra.mxu0 0.0
    %227 = vmatprep.subr.mxu0 0.0
    %228 = vmatpush1.msra.mxu0 0.0
    %229 = vmatprep.subr.mxu0 0.0
    %230 = vmatpush1.msra.mxu0 0.0
    %231 = vmatprep.subr.mxu0 0.0
    %232 = vmatpush1.msra.mxu0 0.0
    %233 = vmatprep.subr.mxu0 0.0
    %234 = vmatpush1.msra.mxu0 0.0
    %235 = vmatprep.subr.mxu0 0.0
    %236 = vmatpush1.msra.mxu0 0.0
    %237 = vmatprep.subr.mxu0 0.0
    %238 = vmatpush1.msra.mxu0 0.0
    %239 = vmatprep.subr.mxu0 0.0
    %240 = vmatpush1.msra.mxu0 0.0
    %241 = vmatprep.subr.mxu0 0.0
    %242 = vmatpush1.msra.mxu0 0.0
    %243 = vmatprep.subr.mxu0 0.0
    %244 = vmatpush1.msra.mxu0 0.0
    %245 = vmatprep.subr.mxu0 0.0
    %246 = vmatpush1.msra.mxu0 0.0
    %247 = vmatprep.subr.mxu0 0.0
    %248 = vmatpush1.msra.mxu0 0.0
    %249 = vmatprep.subr.mxu0 0.0
    %250 = vmatpush1.msra.mxu0 0.0
    %251 = vmatprep.subr.mxu0 0.0
    %252 = vmatpush1.msra.mxu0 0.0
    %253 = vmatprep.subr.mxu0 0.0
    %254 = vmatpush1.msra.mxu0 0.0
    %255 = vmatprep.subr.mxu0 0.0
    %256 = vmatpush1.msra.mxu0 0.0
    %257 = vmatprep.subr.mxu0 0.0
    %258 = vmatpush1.msra.mxu0 0.0
    %259 = vmatprep.subr.mxu0 0.0
    %260 = vmatpush1.msra.mxu0 0.0
    %261 = vmatprep.subr.mxu0 0.0
    %262 = vmatpush1.msra.mxu0 0.0
    %263 = vmatprep.subr.mxu0 0.0
    %264 = vmatpush1.msra.mxu0 0.0
    %265 = vmatprep.subr.mxu0 0.0
    %266 = vmatpush1.msra.mxu0 0.0
    %267 = vmatprep.subr.mxu0 0.0
    %268 = vmatpush1.msra.mxu0 0.0
    %269 = vmatprep.subr.mxu0 0.0
    %270 = vmatpush1.msra.mxu0 0.0
    %271 = vmatprep.subr.mxu0 0.0
    %272 = vmatpush1.msra.mxu0 0.0
    %273 = vmatprep.subr.mxu0 0.0
    %274 = vmatpush1.msra.mxu0 0.0
    %275 = vmatprep.subr.mxu0 0.0
    %276 = vmatpush1.msra.mxu0 0.0
    %277 = vmatprep.subr.mxu0 0.0
    %278 = vmatpush1.msra.mxu0 0.0
    %279 = vmatprep.mubr.f32.mxu0 0.0
    %280 = vmatmul.mubr.f32.gmra.mrb[0].mxu0 %v213
    %v281 = vpop.f32.mrb[0].mxu0
    %v282 = vadd.f32 %v211, %v281
    %v283 = vpop.f32.mrb[0].mxu0
    %284 = vdwg.mxu0
    %v285 = vadd.f32 %v204, %v282
    %v286 = vxor.u32 %v285, 2147483648
    %v287 = vmul.f32 %v286, 1.442695
    %v288 = vpow.pop %v287
    %v289 = vadd.f32 %v288, 1.0
    %v290 = vrcp.pop %v289
    %v291 = vmul.f32 1.0, %v290
    %293 = vrot.lane.b32.xlu0 %v282, 64
    %v294 = vpop.permute.xlu0 %293
    %v296 = vmul.f32 %v291, %v294
    %298 = vrot.lane.b32.xlu0 %v296, 64
    %v299 = vpop.permute.xlu0 %298
    %v301 = vadd.f32 %v204, %v299
    %v302 = vtanh.pop %v301
    %v303 = vsub.f32 1.0, %v291
    %305 = vrot.lane.b32.xlu0 %v302, 96
    %v306 = vpop.permute.xlu0 %305
    %v308 = vmul.f32 %v303, %v306
    %v309 = vlaneseq
    %v310 = vshrl.u32 %v309, 7
    %v311 = vsub.s32 0, %v310
    %v312 = vrot.slane %v127, %v311
    %313 = vrot.lane.b32.xlu0 %v312, 32
    %v314 = vpop.permute.xlu0 %313
    %v316 = vmul.f32 %v291, %v314
    %v317 = vadd.f32 %v308, %v316
    %v318 = vld [vmem:[%s7] sm:$0xff]
    %v319 = vld [vmem:[%s7 + $0x8] sm:$0xff]
    %v320 = vld [vmem:[%s7 + $0x10] sm:$0xff]
    %v321 = vld [vmem:[%s7 + $0x18] sm:$0xff]
    %v322 = vld [vmem:[%s8] sm:$0x1]
    %324 = vrot.lane.b32.xlu0 %v317, 96
    %v325 = vpop.permute.xlu0 %324
    %v326 = vsel %vm133, %v325, 0
    %328 = vmatprep.subr.mxu0 0.0
    %329 = vmatpush1.msra.mxu0 %v318
    %330 = vmatprep.subr.mxu0 0.0
    %331 = vmatpush1.msra.mxu0 %v319
    %332 = vmatprep.subr.mxu0 0.0
    %333 = vmatpush1.msra.mxu0 %v320
    %334 = vmatprep.subr.mxu0 0.0
    %335 = vmatpush1.msra.mxu0 %v321
    %336 = vmatprep.subr.mxu0 0.0
    %337 = vmatpush1.msra.mxu0 0.0
    %338 = vmatprep.subr.mxu0 0.0
    %339 = vmatpush1.msra.mxu0 0.0
    %340 = vmatprep.subr.mxu0 0.0
    %341 = vmatpush1.msra.mxu0 0.0
    %342 = vmatprep.subr.mxu0 0.0
    %343 = vmatpush1.msra.mxu0 0.0
    %344 = vmatprep.subr.mxu0 0.0
    %345 = vmatpush1.msra.mxu0 0.0
    %346 = vmatprep.subr.mxu0 0.0
    %347 = vmatpush1.msra.mxu0 0.0
    %348 = vmatprep.subr.mxu0 0.0
    %349 = vmatpush1.msra.mxu0 0.0
    %350 = vmatprep.subr.mxu0 0.0
    %351 = vmatpush1.msra.mxu0 0.0
    %352 = vmatprep.subr.mxu0 0.0
    %353 = vmatpush1.msra.mxu0 0.0
    %354 = vmatprep.subr.mxu0 0.0
    %355 = vmatpush1.msra.mxu0 0.0
    %356 = vmatprep.subr.mxu0 0.0
    %357 = vmatpush1.msra.mxu0 0.0
    %358 = vmatprep.subr.mxu0 0.0
    %359 = vmatpush1.msra.mxu0 0.0
    %360 = vmatprep.subr.mxu0 0.0
    %361 = vmatpush1.msra.mxu0 0.0
    %362 = vmatprep.subr.mxu0 0.0
    %363 = vmatpush1.msra.mxu0 0.0
    %364 = vmatprep.subr.mxu0 0.0
    %365 = vmatpush1.msra.mxu0 0.0
    %366 = vmatprep.subr.mxu0 0.0
    %367 = vmatpush1.msra.mxu0 0.0
    %368 = vmatprep.subr.mxu0 0.0
    %369 = vmatpush1.msra.mxu0 0.0
    %370 = vmatprep.subr.mxu0 0.0
    %371 = vmatpush1.msra.mxu0 0.0
    %372 = vmatprep.subr.mxu0 0.0
    %373 = vmatpush1.msra.mxu0 0.0
    %374 = vmatprep.subr.mxu0 0.0
    %375 = vmatpush1.msra.mxu0 0.0
    %376 = vmatprep.subr.mxu0 0.0
    %377 = vmatpush1.msra.mxu0 0.0
    %378 = vmatprep.subr.mxu0 0.0
    %379 = vmatpush1.msra.mxu0 0.0
    %380 = vmatprep.subr.mxu0 0.0
    %381 = vmatpush1.msra.mxu0 0.0
    %382 = vmatprep.subr.mxu0 0.0
    %383 = vmatpush1.msra.mxu0 0.0
    %384 = vmatprep.subr.mxu0 0.0
    %385 = vmatpush1.msra.mxu0 0.0
    %386 = vmatprep.subr.mxu0 0.0
    %387 = vmatpush1.msra.mxu0 0.0
    %388 = vmatprep.subr.mxu0 0.0
    %389 = vmatpush1.msra.mxu0 0.0
    %390 = vmatprep.subr.mxu0 0.0
    %391 = vmatpush1.msra.mxu0 0.0
    %392 = vmatprep.mubr.f32.mxu0 0.0
    %393 = vmatmul.mubr.f32.gmra.mrb[0].mxu0 %v326
    %v394 = vpop.f32.mrb[0].mxu0
    %v395 = vadd.f32 %v322, %v394
    %v396 = vpop.f32.mrb[0].mxu0
    %397 = vdwg.mxu0
    %398 = vst [vmem:[#allocation3] sm:$0x1] %v395
    %vm400 = vcmask 253952
    %401 = vst.msk [vmem:[#allocation5] sm:$0x1] %vm400, %v325
    // Predicated region
    $region38: #{decoder_forward.1} parent=1 // pred_check
      _
    $region39: #{decoder_forward.1} parent=1 // pred_check_branch
      %403 = sbr.rel (0) target = $region41
    $region40: #{decoder_forward.1} parent=1 // pred_region
      %s405 = ssub.s32 16, 16
      %406 = vsyncadd [#allocation4], %s405
      %s408 = sshll.u32 [#allocation3], 4
      %s409 = int_to_ptr.vmem [resolvable:$true] %s408
      %411 = dma.vmem_to_hbm [thread:$0]  %s409, 16, %s9, [#allocation4]
    $region41: #{decoder_forward.1} parent=1 // pred_fallthru
      _
    // Predicated region
    $region42: #{decoder_forward.1} parent=1 // pred_check
      _
    $region43: #{decoder_forward.1} parent=1 // pred_check_branch
      %413 = sbr.rel (0) target = $region45
    $region44: #{decoder_forward.1} parent=1 // pred_region
      %s415 = ssub.s32 16, 16
      %416 = vsyncadd [#allocation6], %s415
      %s418 = sshll.u32 [#allocation5], 4
      %s419 = int_to_ptr.vmem [resolvable:$true] %s418
      %421 = dma.vmem_to_hbm [thread:$0]  %s419, 16, %s10, [#allocation6]
    $region45: #{decoder_forward.1} parent=1 // pred_fallthru
      _
    // Predicated region
    $region46: #{decoder_forward.1} parent=1 // pred_check
      _
    $region47: #{decoder_forward.1} parent=1 // pred_check_branch
      %423 = sbr.rel (0) target = $region49
    $region48: #{decoder_forward.1} parent=1 // pred_region
      %424 = dma.done [#allocation4], 16
    $region49: #{decoder_forward.1} parent=1 // pred_fallthru
      _
    // Predicated region
    $region50: #{decoder_forward.1} parent=1 // pred_check
      _
    $region51: #{decoder_forward.1} parent=1 // pred_check_branch
      %426 = sbr.rel (0) target = $region53
    $region52: #{decoder_forward.1} parent=1 // pred_region
      %427 = dma.done [#allocation6], 16
    $region53: #{decoder_forward.1} parent=1 // pred_fallthru
      _
    %428 = vsyncpa [#allocation4], 1
    %429 = vsyncpa [#allocation6], 1

</llo_original>
